<compile_context>
chip_gen: v6e
topology: v6e:2x2x1
jax: 0.10.0
libtpu: 0.0.40
codegen_flags: <defaults>
</compile_context>

<pallas_src>
import math

import jax
import jax.numpy as jnp
from jax.experimental import pallas as pl
from jax.experimental.pallas import tpu as pltpu


_INV_SQRT2 = 1.0 / math.sqrt(2.0)


def _gelu_exact(x):
    # nn.GELU() default is the exact erf formulation (keeps PyTorch parity).
    # TODO(synk): on v6e/v7x, if the epilogue's VALU slot becomes co-critical
    # with vmatmul, switch to the tanh approximation (runs on the idle EUP).
    return 0.5 * x * (1.0 + jax.lax.erf(x * _INV_SQRT2))


def _round_up(v, m):
    return (v + m - 1) // m * m


# ---------------------------------------------------------------------------
# Kernel: one (tile_m, C_in) token slab -> (tile_m, C_out_p) output slab.
# Weights arrive pre-transposed to (in, out) layout, so both matmuls are plain
# (M,K)@(K,N) contractions feeding the MXU with f32 accumulation.
# ---------------------------------------------------------------------------
def _mlp_kernel(x_ref, w1_ref, b1_ref, w2_ref, b2_ref, o_ref):
    x = x_ref[...]

    # fc1: (TM, C_in) @ (C_in, H_p), native operand dtype, f32 accumulation.
    h = jnp.dot(x, w1_ref[...], preferred_element_type=jnp.float32)
    # Bias + exact-erf GELU epilogue in f32.
    h = _gelu_exact(h + b1_ref[...].astype(jnp.float32))

    # fc2: cast the activation back to the weight dtype so bf16 models take
    # the bf16-native MXU path; f32 models are unchanged.
    out = jnp.dot(h.astype(w2_ref.dtype), w2_ref[...],
                  preferred_element_type=jnp.float32)
    out = out + b2_ref[...].astype(jnp.float32)
    o_ref[...] = out.astype(o_ref.dtype)


# ---------------------------------------------------------------------------
# Init-time parameter preparation (one-off; NOT per forward call).
# ---------------------------------------------------------------------------
def prepare_mlp_params(w1, b1, w2, b2):
    """Transpose PyTorch (out, in) weights to (in, out) matmul layout and
    zero-pad hidden / output channels up to the 128-lane width."""
    H, C_in = w1.shape
    C_out, H2 = w2.shape
    assert H2 == H, "fc1/fc2 hidden size mismatch"
    H_p = max(_round_up(H, 128), 128)
    C_out_p = max(_round_up(C_out, 128), 128)
    w1t = jnp.zeros((C_in, H_p), w1.dtype).at[:, :H].set(w1.T)
    b1p = jnp.zeros((1, H_p), b1.dtype).at[:, :H].set(b1.reshape(1, H))
    w2t = jnp.zeros((H_p, C_out_p), w2.dtype).at[:H, :C_out].set(w2.T)
    b2p = jnp.zeros((1, C_out_p), b2.dtype).at[:, :C_out].set(b2.reshape(1, C_out))
    return (w1t, b1p, w2t, b2p), C_out


# ---------------------------------------------------------------------------
# Generation-aware VMEM budgeting.
# ---------------------------------------------------------------------------
def _vmem_budget_and_limit():
    cap = None
    try:
        info = pltpu.get_tpu_info()
        cap = getattr(info, "vmem_capacity_bytes", None)
    except Exception:
        cap = None
    if not cap:
        cap = 64 * 1024 * 1024  # conservative (v7x-sized) fallback
    limit = int(cap) * 3 // 4                      # leave compiler scratch headroom
    budget = max(limit - 8 * 1024 * 1024, 16 * 1024 * 1024)
    return budget, limit


def _choose_tile_m(M, C_in, H_p, C_out_p, x_itemsize, w_itemsize,
                   budget_bytes, weight_buffers, row_align):
    """Largest MXU-friendly token tile that keeps the kernel inside VMEM."""
    # Resident weights + biases (buffer count: 1 if single-buffered, else 2).
    fixed = weight_buffers * (H_p * C_in + C_out_p * H_p + H_p + C_out_p) * w_itemsize
    # Per token row: double-buffered x/out tiles, f32 hidden activation,
    # f32 accumulator, plus the weight-dtype copy of h for the fc2 operand.
    per_row = (2 * C_in * x_itemsize + 2 * C_out_p * x_itemsize
               + 4 * H_p + 4 * C_out_p + w_itemsize * H_p)
    avail = budget_bytes - fixed
    if avail <= per_row * 256:
        # TODO(synk): for very large C/H (e.g. C=1024/H=4096 on v7x) add a
        # hidden/output-channel grid axis + f32 accumulator scratch instead of
        # shrinking the token tile below 256 rows.
        tile = 256
    else:
        tile = min(1024, (int(avail // per_row) // 256) * 256)
    # Keep >= 2 grid steps when there is enough work so a 2-TC part (v7x) can
    # shard the "parallel" token axis across both TensorCores.
    if M >= 2 * 256:
        tile = min(tile, _round_up(pl.cdiv(M, 2), 256))
    # Never tile wider than the (sublane-aligned) token count itself.
    return max(row_align, min(tile, _round_up(M, row_align)))


# ---------------------------------------------------------------------------
# Per-call wrapper.
# ---------------------------------------------------------------------------
def mlp_pallas(x, params, out_features, *, tile_m=None):
    """Fused fc2(GELU(fc1(x))).  drop_rate == 0.0 so dropout is identity.

    x      : (B, N, C_in)
    params : output of prepare_mlp_params -- (W1'(C_in,H_p), b1(1,H_p),
             W2'(H_p,C_out_p), b2(1,C_out_p))
    """
    w1t, b1p, w2t, b2p = params
    B, N, C_in = x.shape
    assert w1t.shape[0] == C_in
    H_p = w1t.shape[1]
    C_out_p = w2t.shape[1]
    M = B * N
    dtype = x.dtype
    x_itemsize = jnp.dtype(dtype).itemsize
    w_itemsize = jnp.dtype(w1t.dtype).itemsize
    # Sublane packing alignment: f32 -> 8, bf16 -> 16, int8/fp8 -> 32 rows.
    row_align = 32 // x_itemsize

    budget, vmem_limit = _vmem_budget_and_limit()
    x2 = x.reshape(M, C_in)

    def run(single_buffer_weights):
        weight_buffers = 1 if single_buffer_weights else 2
        if tile_m is None:
            tm = _choose_tile_m(M, C_in, H_p, C_out_p, x_itemsize, w_itemsize,
                                budget, weight_buffers, row_align)
        else:
            tm = max(row_align, _round_up(int(tile_m), row_align))

        M_pad = _round_up(M, tm)
        xp = x2 if M_pad == M else jnp.pad(x2, ((0, M_pad - M), (0, 0)))

        def w_spec(shape):
            if single_buffer_weights:
                # Constant index_map -> weight stays VMEM-resident; a single
                # buffer suffices (halves the fixed VMEM footprint).
                return pl.BlockSpec(shape, lambda i: (0, 0),
                                    pipeline_mode=pl.Buffered(1))
            return pl.BlockSpec(shape, lambda i: (0, 0))

        cost = pl.CostEstimate(
            flops=2 * M_pad * (C_in * H_p + H_p * C_out_p),
            transcendentals=M_pad * H_p,
            bytes_accessed=(xp.size * x_itemsize
                            + (w1t.size + b1p.size + w2t.size + b2p.size) * w_itemsize
                            + M_pad * C_out_p * x_itemsize),
        )

        return pl.pallas_call(
            _mlp_kernel,
            out_shape=jax.ShapeDtypeStruct((M_pad, C_out_p), dtype),
            grid_spec=pltpu.PrefetchScalarGridSpec(
                num_scalar_prefetch=0,
                grid=(M_pad // tm,),
                in_specs=[
                    pl.BlockSpec((tm, C_in), lambda i: (i, 0)),  # x token tile
                    w_spec((C_in, H_p)),                         # W1' (resident)
                    w_spec((1, H_p)),                            # b1
                    w_spec((H_p, C_out_p)),                      # W2' (resident)
                    w_spec((1, C_out_p)),                        # b2
                ],
                out_specs=pl.BlockSpec((tm, C_out_p), lambda i: (i, 0)),
            ),
            compiler_params=pltpu.CompilerParams(
                dimension_semantics=("parallel",),
                vmem_limit_bytes=vmem_limit,
            ),
            cost_estimate=cost,
        )(xp, w1t, b1p, w2t, b2p)

    try:
        out2 = run(True)
    except Exception:
        # Fallback for lowerings that reject single-buffered
        # (pipeline_mode=pl.Buffered(1)) specs: default double buffering.
        out2 = run(False)

    return out2[:M, :out_features].reshape(B, N, out_features)


def mlp_reference(x, w1, b1, w2, b2):
    h = jnp.einsum("bnc,hc->bnh", x, w1) + b1
    h = _gelu_exact(h)
    return jnp.einsum("bnh,oh->bno", h, w2) + b2


if __name__ == "__main__":
    # Shapes consistent with the module's forward:
    #   in_features=16, hidden_features=32, out_features=16, drop_rate=0.0
    in_features, hidden_features, out_features = 16, 32, 16

    key = jax.random.PRNGKey(0)
    kx, k1, k2, k3, k4, kx2 = jax.random.split(key, 6)

    # Deterministic synthetic parameters (trunc_normal-like scale 0.02),
    # PyTorch nn.Linear layout: W (out, in), b (out,).
    w1 = 0.02 * jax.random.normal(k1, (hidden_features, in_features), jnp.float32)
    b1 = 0.02 * jax.random.normal(k2, (hidden_features,), jnp.float32)
    w2 = 0.02 * jax.random.normal(k3, (out_features, hidden_features), jnp.float32)
    b2 = 0.02 * jax.random.normal(k4, (out_features,), jnp.float32)

    # One-time, init-time weight transpose + channel padding.
    params, c_out = prepare_mlp_params(w1, b1, w2, b2)

    # Case 1: B=2, N=8 tokens.
    x = jax.random.normal(kx, (2, 8, in_features), dtype=jnp.float32)
    out = jax.block_until_ready(mlp_pallas(x, params, c_out))
    ref = mlp_reference(x, w1, b1, w2, b2)
    assert out.shape == (2, 8, out_features)
    assert jnp.allclose(out, ref, atol=1e-5, rtol=1e-5), "mismatch vs reference"

    # Case 2: ragged token count (M=14) exercises the wrapper-side padding path.
    x_r = jax.random.normal(kx2, (2, 7, in_features), dtype=jnp.float32)
    out_r = jax.block_until_ready(mlp_pallas(x_r, params, c_out))
    ref_r = mlp_reference(x_r, w1, b1, w2, b2)
    assert out_r.shape == (2, 7, out_features)
    assert jnp.allclose(out_r, ref_r, atol=1e-5, rtol=1e-5), "ragged mismatch"

    print("KERNEL_OK")
</pallas_src>

<mosaic_0001>
module attributes {stable_mosaic.version = 11 : i64} {
  func.func @_mlp_kernel(%arg0: i32, %arg1: memref<16x16xf32, #tpu.memory_space<vmem>>, %arg2: memref<16x128xf32, #tpu.memory_space<vmem>>, %arg3: memref<1x128xf32, #tpu.memory_space<vmem>>, %arg4: memref<128x128xf32, #tpu.memory_space<vmem>>, %arg5: memref<1x128xf32, #tpu.memory_space<vmem>>, %arg6: memref<16x128xf32, #tpu.memory_space<vmem>>) attributes {dimension_semantics = [#tpu.dimension_semantics<parallel>], iteration_bounds = array<i64: 1>, scalar_prefetch = 0 : i64, scratch_operands = 0 : i64, tpu.core_type = #tpu.core_type<tc>, window_params = [{transform_indices = @transform_0, window_bounds = array<i64: 16, 16>}, {pipeline_mode = #tpu.pipeline_mode<synchronous>, transform_indices = @transform_1, window_bounds = array<i64: 16, 128>}, {pipeline_mode = #tpu.pipeline_mode<synchronous>, transform_indices = @transform_2, window_bounds = array<i64: 1, 128>}, {pipeline_mode = #tpu.pipeline_mode<synchronous>, transform_indices = @transform_3, window_bounds = array<i64: 128, 128>}, {pipeline_mode = #tpu.pipeline_mode<synchronous>, transform_indices = @transform_4, window_bounds = array<i64: 1, 128>}, {transform_indices = @transform_5, window_bounds = array<i64: 16, 128>}]} {
    %c0 = arith.constant 0 : index
    %c0_0 = arith.constant 0 : index
    %0 = vector.load %arg1[%c0, %c0_0] : memref<16x16xf32, #tpu.memory_space<vmem>>, vector<16x16xf32>
    %c0_1 = arith.constant 0 : index
    %c0_2 = arith.constant 0 : index
    %1 = vector.load %arg2[%c0_1, %c0_2] : memref<16x128xf32, #tpu.memory_space<vmem>>, vector<16x128xf32>
    %cst = arith.constant dense<0.000000e+00> : vector<16x128xf32>
    %2 = tpu.matmul %0, %1, %cst {dimension_numbers = #tpu.dot_dimension_numbers<[1], [0], [0], [1], [0, 0, 1, 1], [], []>} : vector<16x16xf32>, vector<16x128xf32>, vector<16x128xf32> -> vector<16x128xf32>
    %c0_3 = arith.constant 0 : index
    %c0_4 = arith.constant 0 : index
    %3 = vector.load %arg3[%c0_3, %c0_4] : memref<1x128xf32, #tpu.memory_space<vmem>>, vector<1x128xf32>
    %4 = vector.broadcast %3 : vector<1x128xf32> to vector<16x128xf32>
    %5 = arith.addf %2, %4 : vector<16x128xf32>
    %cst_5 = arith.constant 5.000000e-01 : f32
    %6 = vector.broadcast %cst_5 : f32 to vector<16x128xf32>
    %7 = arith.mulf %6, %5 : vector<16x128xf32>
    %cst_6 = arith.constant 0.707106769 : f32
    %8 = vector.broadcast %cst_6 : f32 to vector<16x128xf32>
    %9 = arith.mulf %5, %8 : vector<16x128xf32>
    %10 = math.erf %9 : vector<16x128xf32>
    %cst_7 = arith.constant 1.000000e+00 : f32
    %11 = vector.broadcast %cst_7 : f32 to vector<16x128xf32>
    %12 = arith.addf %11, %10 : vector<16x128xf32>
    %13 = arith.mulf %7, %12 : vector<16x128xf32>
    %c0_8 = arith.constant 0 : index
    %c0_9 = arith.constant 0 : index
    %14 = vector.load %arg4[%c0_8, %c0_9] : memref<128x128xf32, #tpu.memory_space<vmem>>, vector<128x128xf32>
    %cst_10 = arith.constant dense<0.000000e+00> : vector<16x128xf32>
    %15 = tpu.matmul %13, %14, %cst_10 {dimension_numbers = #tpu.dot_dimension_numbers<[1], [0], [0], [1], [0, 0, 1, 1], [], []>} : vector<16x128xf32>, vector<128x128xf32>, vector<16x128xf32> -> vector<16x128xf32>
    %c0_11 = arith.constant 0 : index
    %c0_12 = arith.constant 0 : index
    %16 = vector.load %arg5[%c0_11, %c0_12] : memref<1x128xf32, #tpu.memory_space<vmem>>, vector<1x128xf32>
    %17 = vector.broadcast %16 : vector<1x128xf32> to vector<16x128xf32>
    %18 = arith.addf %15, %17 : vector<16x128xf32>
    %c0_13 = arith.constant 0 : index
    %c0_14 = arith.constant 0 : index
    %19 = vector.load %arg6[%c0_13, %c0_14] : memref<16x128xf32, #tpu.memory_space<vmem>>, vector<16x128xf32>
    tpu.vector_store %arg6[%c0_13, %c0_14], %18 {strides = array<i32>} : memref<16x128xf32, #tpu.memory_space<vmem>>, vector<16x128xf32>,
    return
  }
  func.func @transform_0(%arg0: i32) -> (i32, i32) {
    %c0_i32 = arith.constant 0 : i32
    %c0_i32_0 = arith.constant 0 : i32
    return %arg0, %c0_i32 : i32, i32
  }
  func.func @transform_1(%arg0: i32) -> (i32, i32) {
    %c0_i32 = arith.constant 0 : i32
    %c0_i32_0 = arith.constant 0 : i32
    %c0_i32_1 = arith.constant 0 : i32
    return %c0_i32, %c0_i32_0 : i32, i32
  }
  func.func @transform_2(%arg0: i32) -> (i32, i32) {
    %c0_i32 = arith.constant 0 : i32
    %c0_i32_0 = arith.constant 0 : i32
    %c0_i32_1 = arith.constant 0 : i32
    return %c0_i32, %c0_i32_0 : i32, i32
  }
  func.func @transform_3(%arg0: i32) -> (i32, i32) {
    %c0_i32 = arith.constant 0 : i32
    %c0_i32_0 = arith.constant 0 : i32
    %c0_i32_1 = arith.constant 0 : i32
    return %c0_i32, %c0_i32_0 : i32, i32
  }
  func.func @transform_4(%arg0: i32) -> (i32, i32) {
    %c0_i32 = arith.constant 0 : i32
    %c0_i32_0 = arith.constant 0 : i32
    %c0_i32_1 = arith.constant 0 : i32
    return %c0_i32, %c0_i32_0 : i32, i32
  }
  func.func @transform_5(%arg0: i32) -> (i32, i32) {
    %c0_i32 = arith.constant 0 : i32
    %c0_i32_0 = arith.constant 0 : i32
    return %arg0, %c0_i32 : i32, i32
  }
}

module attributes {stable_mosaic.version = 11 : i64} {
  func.func @_mlp_kernel(%arg0: i32, %arg1: memref<16x16xf32, #tpu.memory_space<vmem>>, %arg2: memref<16x128xf32, #tpu.memory_space<vmem>>, %arg3: memref<1x128xf32, #tpu.memory_space<vmem>>, %arg4: memref<128x128xf32, #tpu.memory_space<vmem>>, %arg5: memref<1x128xf32, #tpu.memory_space<vmem>>, %arg6: memref<16x128xf32, #tpu.memory_space<vmem>>) attributes {dimension_semantics = [#tpu.dimension_semantics<parallel>], iteration_bounds = array<i64: 1>, scalar_prefetch = 0 : i64, scratch_operands = 0 : i64, tpu.core_type = #tpu.core_type<tc>, window_params = [{transform_indices = @transform_0, window_bounds = array<i64: 16, 16>}, {pipeline_mode = #tpu.pipeline_mode<synchronous>, transform_indices = @transform_1, window_bounds = array<i64: 16, 128>}, {pipeline_mode = #tpu.pipeline_mode<synchronous>, transform_indices = @transform_2, window_bounds = array<i64: 1, 128>}, {pipeline_mode = #tpu.pipeline_mode<synchronous>, transform_indices = @transform_3, window_bounds = array<i64: 128, 128>}, {pipeline_mode = #tpu.pipeline_mode<synchronous>, transform_indices = @transform_4, window_bounds = array<i64: 1, 128>}, {transform_indices = @transform_5, window_bounds = array<i64: 16, 128>}]} {
    %c0 = arith.constant 0 : index
    %c0_0 = arith.constant 0 : index
    %0 = vector.load %arg1[%c0, %c0_0] : memref<16x16xf32, #tpu.memory_space<vmem>>, vector<16x16xf32>
    %c0_1 = arith.constant 0 : index
    %c0_2 = arith.constant 0 : index
    %1 = vector.load %arg2[%c0_1, %c0_2] : memref<16x128xf32, #tpu.memory_space<vmem>>, vector<16x128xf32>
    %cst = arith.constant dense<0.000000e+00> : vector<16x128xf32>
    %2 = tpu.matmul %0, %1, %cst {dimension_numbers = #tpu.dot_dimension_numbers<[1], [0], [0], [1], [0, 0, 1, 1], [], []>} : vector<16x16xf32>, vector<16x128xf32>, vector<16x128xf32> -> vector<16x128xf32>
    %c0_3 = arith.constant 0 : index
    %c0_4 = arith.constant 0 : index
    %3 = vector.load %arg3[%c0_3, %c0_4] : memref<1x128xf32, #tpu.memory_space<vmem>>, vector<1x128xf32>
    %4 = vector.broadcast %3 : vector<1x128xf32> to vector<16x128xf32>
    %5 = arith.addf %2, %4 : vector<16x128xf32>
    %cst_5 = arith.constant 5.000000e-01 : f32
    %6 = vector.broadcast %cst_5 : f32 to vector<16x128xf32>
    %7 = arith.mulf %6, %5 : vector<16x128xf32>
    %cst_6 = arith.constant 0.707106769 : f32
    %8 = vector.broadcast %cst_6 : f32 to vector<16x128xf32>
    %9 = arith.mulf %5, %8 : vector<16x128xf32>
    %10 = math.erf %9 : vector<16x128xf32>
    %cst_7 = arith.constant 1.000000e+00 : f32
    %11 = vector.broadcast %cst_7 : f32 to vector<16x128xf32>
    %12 = arith.addf %11, %10 : vector<16x128xf32>
    %13 = arith.mulf %7, %12 : vector<16x128xf32>
    %c0_8 = arith.constant 0 : index
    %c0_9 = arith.constant 0 : index
    %14 = vector.load %arg4[%c0_8, %c0_9] : memref<128x128xf32, #tpu.memory_space<vmem>>, vector<128x128xf32>
    %cst_10 = arith.constant dense<0.000000e+00> : vector<16x128xf32>
    %15 = tpu.matmul %13, %14, %cst_10 {dimension_numbers = #tpu.dot_dimension_numbers<[1], [0], [0], [1], [0, 0, 1, 1], [], []>} : vector<16x128xf32>, vector<128x128xf32>, vector<16x128xf32> -> vector<16x128xf32>
    %c0_11 = arith.constant 0 : index
    %c0_12 = arith.constant 0 : index
    %16 = vector.load %arg5[%c0_11, %c0_12] : memref<1x128xf32, #tpu.memory_space<vmem>>, vector<1x128xf32>
    %17 = vector.broadcast %16 : vector<1x128xf32> to vector<16x128xf32>
    %18 = arith.addf %15, %17 : vector<16x128xf32>
    %c0_13 = arith.constant 0 : index
    %c0_14 = arith.constant 0 : index
    %19 = vector.load %arg6[%c0_13, %c0_14] : memref<16x128xf32, #tpu.memory_space<vmem>>, vector<16x128xf32>
    tpu.vector_store %arg6[%c0_13, %c0_14], %18 {strides = array<i32>} : memref<16x128xf32, #tpu.memory_space<vmem>>, vector<16x128xf32>,
    return
  }
  func.func @transform_0(%arg0: i32) -> (i32, i32) {
    %c0_i32 = arith.constant 0 : i32
    %c0_i32_0 = arith.constant 0 : i32
    return %arg0, %c0_i32 : i32, i32
  }
  func.func @transform_1(%arg0: i32) -> (i32, i32) {
    %c0_i32 = arith.constant 0 : i32
    %c0_i32_0 = arith.constant 0 : i32
    %c0_i32_1 = arith.constant 0 : i32
    return %c0_i32, %c0_i32_0 : i32, i32
  }
  func.func @transform_2(%arg0: i32) -> (i32, i32) {
    %c0_i32 = arith.constant 0 : i32
    %c0_i32_0 = arith.constant 0 : i32
    %c0_i32_1 = arith.constant 0 : i32
    return %c0_i32, %c0_i32_0 : i32, i32
  }
  func.func @transform_3(%arg0: i32) -> (i32, i32) {
    %c0_i32 = arith.constant 0 : i32
    %c0_i32_0 = arith.constant 0 : i32
    %c0_i32_1 = arith.constant 0 : i32
    return %c0_i32, %c0_i32_0 : i32, i32
  }
  func.func @transform_4(%arg0: i32) -> (i32, i32) {
    %c0_i32 = arith.constant 0 : i32
    %c0_i32_0 = arith.constant 0 : i32
    %c0_i32_1 = arith.constant 0 : i32
    return %c0_i32, %c0_i32_0 : i32, i32
  }
  func.func @transform_5(%arg0: i32) -> (i32, i32) {
    %c0_i32 = arith.constant 0 : i32
    %c0_i32_0 = arith.constant 0 : i32
    return %arg0, %c0_i32 : i32, i32
  }
}

</mosaic_0001>

<llo_original>
// kernel: tpu_custom_call.1
$region0: #{tpu_custom_call.1}
  #allocation0 [shape = 'u32[]', space=smem, size = 0x4, offset = 0x4, fixed_abs, tag = 'smem constant byte address 0x4 - core index']
  #allocation1 [shape = 'u32[144,128]{1,0:T(1,128)}', space=vmem, size = 0x12000, scoped, tag = 'internal scratch']
  %s0 = inlined_call_operand.hbm [shape: f32[16,16], index: 0, kind: input, shape index: {}]
  %s1 = inlined_call_operand.hbm [shape: f32[16,128], index: 1, kind: input, shape index: {}]
  %s2 = inlined_call_operand.vmem [shape: f32[1,128], index: 2, kind: input, shape index: {}]
  %s3 = inlined_call_operand.hbm [shape: f32[128,128], index: 3, kind: input, shape index: {}]
  %s4 = inlined_call_operand.vmem [shape: f32[1,128], index: 4, kind: input, shape index: {}]
  %s5 = inlined_call_operand.hbm [shape: f32[16,128], index: 5, kind: output, shape index: {}]
  %s6 = sld [smem:[#allocation0]]
  $region42: #{tpu_custom_call.1} parent=0
    _
  %s8 = ssub.s32 1, %s6
  %s9 = scalar_select 0, %s8, %s6
  $region1: #{tpu_custom_call.1} parent=0
    #allocation2 [shape = 'u8[8192]{0}', space=vmem, size = 0x2000, scoped, tag = 'input window, operand 0, single buffered']
    #allocation3 [shape = 's32[1]{0}', space=sflag, size = 0x4, scoped, tag = 'scoped memory for tpu_custom_call.1']
    #allocation4 [shape = 's32[1]{0}', space=sflag, size = 0x4, scoped, tag = 'scoped memory for tpu_custom_call.1']
    #allocation5 [shape = 'u8[8192]{0}', space=vmem, size = 0x2000, scoped, tag = 'input window, operand 1, single buffered']
    #allocation6 [shape = 's32[1]{0}', space=sflag, size = 0x4, scoped, tag = 'scoped memory for tpu_custom_call.1']
    #allocation7 [shape = 'u8[65536]{0}', space=vmem, size = 0x10000, scoped, tag = 'input window, operand 3, single buffered']
    #allocation8 [shape = 'u8[8192]{0}', space=vmem, size = 0x2000, scoped, tag = 'output window, operand 0, single buffered']
    %10 = vsyncpa [#allocation3], 0
    %11 = vsyncpa [#allocation6], 0
    %12 = vsyncpa [#allocation4], 0
    // Predicated region
    $region2: #{tpu_custom_call.1} parent=1 // pred_check
      _
    $region3: #{tpu_custom_call.1} parent=1 // pred_check_branch
      %14 = sbr.rel (0) target = $region5
    $region4: #{tpu_custom_call.1} parent=1 // pred_region
      %s16 = ssub.s32 256, 256
      %17 = vsyncadd [#allocation3], %s16
      %s18 = sshll.u32 [#allocation2], 4
      %s19 = int_to_ptr.vmem [resolvable:$true] %s18
      %24 = dma.hbm_to_vmem [thread:$0]  %s0, 256, %s19, [#allocation3], 128, 128, 8
    $region5: #{tpu_custom_call.1} parent=1 // pred_fallthru
      _
    // Predicated region
    $region6: #{tpu_custom_call.1} parent=1 // pred_check
      _
    $region7: #{tpu_custom_call.1} parent=1 // pred_check_branch
      %26 = sbr.rel (0) target = $region9
    $region8: #{tpu_custom_call.1} parent=1 // pred_region
      %s28 = ssub.s32 256, 256
      %29 = vsyncadd [#allocation6], %s28
      %s30 = sshll.u32 [#allocation5], 4
      %s31 = int_to_ptr.vmem [resolvable:$true] %s30
      %36 = dma.hbm_to_vmem [thread:$0]  %s1, 256, %s31, [#allocation6], 128, 128, 8
    $region9: #{tpu_custom_call.1} parent=1 // pred_fallthru
      _
    // Predicated region
    $region10: #{tpu_custom_call.1} parent=1 // pred_check
      _
    $region11: #{tpu_custom_call.1} parent=1 // pred_check_branch
      %38 = sbr.rel (0) target = $region13
    $region12: #{tpu_custom_call.1} parent=1 // pred_region
      _
    $region13: #{tpu_custom_call.1} parent=1 // pred_fallthru
      _
    // Predicated region
    $region14: #{tpu_custom_call.1} parent=1 // pred_check
      _
    $region15: #{tpu_custom_call.1} parent=1 // pred_check_branch
      %40 = sbr.rel (0) target = $region17
    $region16: #{tpu_custom_call.1} parent=1 // pred_region
      %s42 = ssub.s32 2048, 2048
      %43 = vsyncadd [#allocation6], %s42
      %s44 = sshll.u32 [#allocation7], 4
      %s45 = int_to_ptr.vmem [resolvable:$true] %s44
      %50 = dma.hbm_to_vmem [thread:$0]  %s3, 2048, %s45, [#allocation6], 128, 128, 8
    $region17: #{tpu_custom_call.1} parent=1 // pred_fallthru
      _
    // Predicated region
    $region18: #{tpu_custom_call.1} parent=1 // pred_check
      _
    $region19: #{tpu_custom_call.1} parent=1 // pred_check_branch
      %52 = sbr.rel (0) target = $region21
    $region20: #{tpu_custom_call.1} parent=1 // pred_region
      _
    $region21: #{tpu_custom_call.1} parent=1 // pred_fallthru
      _
    // Predicated region
    $region22: #{tpu_custom_call.1} parent=1 // pred_check
      _
    $region23: #{tpu_custom_call.1} parent=1 // pred_check_branch
      %54 = sbr.rel (0) target = $region25
    $region24: #{tpu_custom_call.1} parent=1 // pred_region
      %55 = dma.done [#allocation3], 256
    $region25: #{tpu_custom_call.1} parent=1 // pred_fallthru
      _
    // Predicated region
    $region26: #{tpu_custom_call.1} parent=1 // pred_check
      _
    $region27: #{tpu_custom_call.1} parent=1 // pred_check_branch
      %57 = sbr.rel (0) target = $region29
    $region28: #{tpu_custom_call.1} parent=1 // pred_region
      %58 = dma.done [#allocation6], 256
    $region29: #{tpu_custom_call.1} parent=1 // pred_fallthru
      _
    // Predicated region
    $region30: #{tpu_custom_call.1} parent=1 // pred_check
      _
    $region31: #{tpu_custom_call.1} parent=1 // pred_check_branch
      %60 = sbr.rel (0) target = $region33
    $region32: #{tpu_custom_call.1} parent=1 // pred_region
      %61 = dma.done [#allocation6], 2048
    $region33: #{tpu_custom_call.1} parent=1 // pred_fallthru
      _
    %v62 = vld [vmem:[#allocation2] sm:$0xff]
    %v63 = vld [vmem:[#allocation2 + $0x8] sm:$0xff]
    %v64 = vld [vmem:[#allocation5] sm:$0xff]
    %v65 = vld [vmem:[#allocation5 + $0x8] sm:$0xff]
    %v66 = vld [vmem:[%s2] sm:$0x1]
    %v68 = vlaneseq
    %v69 = vshrl.u32 %v68, 7
    %v70 = vsub.s32 0, %v69
    %v71 = vrot.slane %v66, %v70
    %vm73 = vcmask 130048
    %v75 = vsel %vm73, %v62, 0
    %v78 = vsel %vm73, %v63, 0
    %80 = vmatprep.subr.mxu0 0.0
    %81 = vmatpush1.msra.mxu0 0.0
    %82 = vmatprep.subr.mxu0 0.0
    %83 = vmatpush1.msra.mxu0 0.0
    %84 = vmatprep.subr.mxu0 0.0
    %85 = vmatpush1.msra.mxu0 0.0
    %86 = vmatprep.subr.mxu0 0.0
    %87 = vmatpush1.msra.mxu0 0.0
    %88 = vmatprep.subr.mxu0 0.0
    %89 = vmatpush1.msra.mxu0 0.0
    %90 = vmatprep.subr.mxu0 0.0
    %91 = vmatpush1.msra.mxu0 0.0
    %92 = vmatprep.subr.mxu0 0.0
    %93 = vmatpush1.msra.mxu0 0.0
    %94 = vmatprep.subr.mxu0 0.0
    %95 = vmatpush1.msra.mxu0 0.0
    %96 = vmatprep.subr.mxu0 0.0
    %97 = vmatpush1.msra.mxu0 0.0
    %98 = vmatprep.subr.mxu0 0.0
    %99 = vmatpush1.msra.mxu0 0.0
    %100 = vmatprep.subr.mxu0 0.0
    %101 = vmatpush1.msra.mxu0 0.0
    %102 = vmatprep.subr.mxu0 0.0
    %103 = vmatpush1.msra.mxu0 0.0
    %104 = vmatprep.subr.mxu0 0.0
    %105 = vmatpush1.msra.mxu0 0.0
    %106 = vmatprep.subr.mxu0 0.0
    %107 = vmatpush1.msra.mxu0 0.0
    %108 = vmatprep.subr.mxu0 0.0
    %109 = vmatpush1.msra.mxu0 %v65
    %110 = vmatprep.subr.mxu0 0.0
    %111 = vmatpush1.msra.mxu0 %v64
    %112 = vmatprep.subr.mxu0 0.0
    %113 = vmatpush2.msra.mxu0 0.0
    %114 = vmatprep.subr.mxu0 0.0
    %115 = vmatpush2.msra.mxu0 0.0
    %116 = vmatprep.subr.mxu0 0.0
    %117 = vmatpush2.msra.mxu0 0.0
    %118 = vmatprep.subr.mxu0 0.0
    %119 = vmatpush2.msra.mxu0 0.0
    %120 = vmatprep.subr.mxu0 0.0
    %121 = vmatpush2.msra.mxu0 0.0
    %122 = vmatprep.subr.mxu0 0.0
    %123 = vmatpush2.msra.mxu0 0.0
    %124 = vmatprep.subr.mxu0 0.0
    %125 = vmatpush2.msra.mxu0 0.0
    %126 = vmatprep.subr.mxu0 0.0
    %127 = vmatpush2.msra.mxu0 0.0
    %128 = vmatprep.subr.mxu0 0.0
    %129 = vmatpush2.msra.mxu0 0.0
    %130 = vmatprep.subr.mxu0 0.0
    %131 = vmatpush2.msra.mxu0 0.0
    %132 = vmatprep.subr.mxu0 0.0
    %133 = vmatpush2.msra.mxu0 0.0
    %134 = vmatprep.subr.mxu0 0.0
    %135 = vmatpush2.msra.mxu0 0.0
    %136 = vmatprep.subr.mxu0 0.0
    %137 = vmatpush2.msra.mxu0 0.0
    %138 = vmatprep.subr.mxu0 0.0
    %139 = vmatpush2.msra.mxu0 0.0
    %140 = vmatprep.subr.mxu0 0.0
    %141 = vmatpush2.msra.mxu0 0.0
    %142 = vmatprep.subr.mxu0 0.0
    %143 = vmatpush2.msra.mxu0 0.0
    %144 = vmatprep.mubr.f32.mxu0 0.0
    %145 = vmatmul.mubr.f32.gmra.mxu0 %v75
    %v146 = vpop.f32.mrf.mxu0
    %v147 = vadd.f32 %v71, %v146
    %v148 = vpop.f32.mrf.mxu0
    %149 = vmatprep.mubr.f32.mxu0 0.0
    %150 = vmatmul.mubr.f32.gmra.mxu0 %v78
    %v151 = vpop.f32.mrf.mxu0
    %v152 = vadd.f32 %v71, %v151
    %v153 = vpop.f32.mrf.mxu0
    %154 = vdwg.mxu0
    %v155 = vmul.f32 %v147, 0.5
    %v156 = vmul.f32 %v152, 0.5
    %v157 = vmul.f32 %v147, 0.70710677
    %v158 = vmul.f32 %v152, 0.70710677
    %v159 = verf.f32.pop %v157
    %v160 = verf.f32.pop %v158
    %v161 = vadd.f32 %v159, 1.0
    %v162 = vadd.f32 %v160, 1.0
    %v163 = vmul.f32 %v155, %v161
    %v164 = vmul.f32 %v156, %v162
    %v165 = vld [vmem:[#allocation7] sm:$0xff]
    %v166 = vld [vmem:[#allocation7 + $0x8] sm:$0xff]
    %v167 = vld [vmem:[#allocation7 + $0x10] sm:$0xff]
    %v168 = vld [vmem:[#allocation7 + $0x18] sm:$0xff]
    %v169 = vld [vmem:[#allocation7 + $0x20] sm:$0xff]
    %v170 = vld [vmem:[#allocation7 + $0x28] sm:$0xff]
    %v171 = vld [vmem:[#allocation7 + $0x30] sm:$0xff]
    %v172 = vld [vmem:[#allocation7 + $0x38] sm:$0xff]
    %v173 = vld [vmem:[#allocation7 + $0x40] sm:$0xff]
    %v174 = vld [vmem:[#allocation7 + $0x48] sm:$0xff]
    %v175 = vld [vmem:[#allocation7 + $0x50] sm:$0xff]
    %v176 = vld [vmem:[#allocation7 + $0x58] sm:$0xff]
    %v177 = vld [vmem:[#allocation7 + $0x60] sm:$0xff]
    %v178 = vld [vmem:[#allocation7 + $0x68] sm:$0xff]
    %v179 = vld [vmem:[#allocation7 + $0x70] sm:$0xff]
    %v180 = vld [vmem:[#allocation7 + $0x78] sm:$0xff]
    %v181 = vld [vmem:[%s4] sm:$0x1]
    %v183 = vlaneseq
    %v184 = vshrl.u32 %v183, 7
    %v185 = vsub.s32 0, %v184
    %v186 = vrot.slane %v181, %v185
    %188 = vmatprep.subr.mxu0 0.0
    %189 = vmatpush1.msra.mxu0 %v180
    %190 = vmatprep.subr.mxu0 0.0
    %191 = vmatpush1.msra.mxu0 %v179
    %192 = vmatprep.subr.mxu0 0.0
    %193 = vmatpush1.msra.mxu0 %v178
    %194 = vmatprep.subr.mxu0 0.0
    %195 = vmatpush1.msra.mxu0 %v177
    %196 = vmatprep.subr.mxu0 0.0
    %197 = vmatpush1.msra.mxu0 %v176
    %198 = vmatprep.subr.mxu0 0.0
    %199 = vmatpush1.msra.mxu0 %v175
    %200 = vmatprep.subr.mxu0 0.0
    %201 = vmatpush1.msra.mxu0 %v174
    %202 = vmatprep.subr.mxu0 0.0
    %203 = vmatpush1.msra.mxu0 %v173
    %204 = vmatprep.subr.mxu0 0.0
    %205 = vmatpush1.msra.mxu0 %v172
    %206 = vmatprep.subr.mxu0 0.0
    %207 = vmatpush1.msra.mxu0 %v171
    %208 = vmatprep.subr.mxu0 0.0
    %209 = vmatpush1.msra.mxu0 %v170
    %210 = vmatprep.subr.mxu0 0.0
    %211 = vmatpush1.msra.mxu0 %v169
    %212 = vmatprep.subr.mxu0 0.0
    %213 = vmatpush1.msra.mxu0 %v168
    %214 = vmatprep.subr.mxu0 0.0
    %215 = vmatpush1.msra.mxu0 %v167
    %216 = vmatprep.subr.mxu0 0.0
    %217 = vmatpush1.msra.mxu0 %v166
    %218 = vmatprep.subr.mxu0 0.0
    %219 = vmatpush1.msra.mxu0 %v165
    %220 = vmatprep.subr.mxu0 0.0
    %221 = vmatpush2.msra.mxu0 0.0
    %222 = vmatprep.subr.mxu0 0.0
    %223 = vmatpush2.msra.mxu0 0.0
    %224 = vmatprep.subr.mxu0 0.0
    %225 = vmatpush2.msra.mxu0 0.0
    %226 = vmatprep.subr.mxu0 0.0
    %227 = vmatpush2.msra.mxu0 0.0
    %228 = vmatprep.subr.mxu0 0.0
    %229 = vmatpush2.msra.mxu0 0.0
    %230 = vmatprep.subr.mxu0 0.0
    %231 = vmatpush2.msra.mxu0 0.0
    %232 = vmatprep.subr.mxu0 0.0
    %233 = vmatpush2.msra.mxu0 0.0
    %234 = vmatprep.subr.mxu0 0.0
    %235 = vmatpush2.msra.mxu0 0.0
    %236 = vmatprep.subr.mxu0 0.0
    %237 = vmatpush2.msra.mxu0 0.0
    %238 = vmatprep.subr.mxu0 0.0
    %239 = vmatpush2.msra.mxu0 0.0
    %240 = vmatprep.subr.mxu0 0.0
    %241 = vmatpush2.msra.mxu0 0.0
    %242 = vmatprep.subr.mxu0 0.0
    %243 = vmatpush2.msra.mxu0 0.0
    %244 = vmatprep.subr.mxu0 0.0
    %245 = vmatpush2.msra.mxu0 0.0
    %246 = vmatprep.subr.mxu0 0.0
    %247 = vmatpush2.msra.mxu0 0.0
    %248 = vmatprep.subr.mxu0 0.0
    %249 = vmatpush2.msra.mxu0 0.0
    %250 = vmatprep.subr.mxu0 0.0
    %251 = vmatpush2.msra.mxu0 0.0
    %252 = vmatprep.mubr.f32.mxu0 0.0
    %253 = vmatmul.mubr.f32.gmra.mxu0 %v163
    %v254 = vpop.f32.mrf.mxu0
    %v255 = vadd.f32 %v186, %v254
    %v256 = vpop.f32.mrf.mxu0
    %257 = vmatprep.mubr.f32.mxu0 0.0
    %258 = vmatmul.mubr.f32.gmra.mxu0 %v164
    %v259 = vpop.f32.mrf.mxu0
    %v260 = vadd.f32 %v186, %v259
    %v261 = vpop.f32.mrf.mxu0
    %262 = vdwg.mxu0
    %263 = vst [vmem:[#allocation8] sm:$0xff] %v255
    %264 = vst [vmem:[#allocation8 + $0x8] sm:$0xff] %v260
    // Predicated region
    $region34: #{tpu_custom_call.1} parent=1 // pred_check
      _
    $region35: #{tpu_custom_call.1} parent=1 // pred_check_branch
      %266 = sbr.rel (0) target = $region37
    $region36: #{tpu_custom_call.1} parent=1 // pred_region
      %s268 = ssub.s32 256, 256
      %269 = vsyncadd [#allocation4], %s268
      %s270 = sshll.u32 [#allocation8], 4
      %s271 = int_to_ptr.vmem [resolvable:$true] %s270
      %276 = dma.vmem_to_hbm [thread:$0]  %s271, 256, %s5, [#allocation4], 128, 128, 8
    $region37: #{tpu_custom_call.1} parent=1 // pred_fallthru
      _
    // Predicated region
    $region38: #{tpu_custom_call.1} parent=1 // pred_check
      _
    $region39: #{tpu_custom_call.1} parent=1 // pred_check_branch
      %278 = sbr.rel (0) target = $region41
    $region40: #{tpu_custom_call.1} parent=1 // pred_region
      %279 = dma.done [#allocation4], 256
    $region41: #{tpu_custom_call.1} parent=1 // pred_fallthru
      _
    %280 = vsyncpa [#allocation3], 1
    %281 = vsyncpa [#allocation6], 1
    %282 = vsyncpa [#allocation4], 1

// kernel: tpu_custom_call.1
$region0: #{tpu_custom_call.1}
  #allocation0 [shape = 'u32[]', space=smem, size = 0x4, offset = 0x4, fixed_abs, tag = 'smem constant byte address 0x4 - core index']
  #allocation1 [shape = 'u32[144,128]{1,0:T(1,128)}', space=vmem, size = 0x12000, scoped, tag = 'internal scratch']
  %s0 = inlined_call_operand.hbm [shape: f32[16,16], index: 0, kind: input, shape index: {}]
  %s1 = inlined_call_operand.hbm [shape: f32[16,128], index: 1, kind: input, shape index: {}]
  %s2 = inlined_call_operand.vmem [shape: f32[1,128], index: 2, kind: input, shape index: {}]
  %s3 = inlined_call_operand.hbm [shape: f32[128,128], index: 3, kind: input, shape index: {}]
  %s4 = inlined_call_operand.vmem [shape: f32[1,128], index: 4, kind: input, shape index: {}]
  %s5 = inlined_call_operand.hbm [shape: f32[16,128], index: 5, kind: output, shape index: {}]
  %s6 = sld [smem:[#allocation0]]
  $region42: #{tpu_custom_call.1} parent=0
    _
  %s8 = ssub.s32 1, %s6
  %s9 = scalar_select 0, %s8, %s6
  $region1: #{tpu_custom_call.1} parent=0
    #allocation2 [shape = 'u8[8192]{0}', space=vmem, size = 0x2000, scoped, tag = 'input window, operand 0, single buffered']
    #allocation3 [shape = 's32[1]{0}', space=sflag, size = 0x4, scoped, tag = 'scoped memory for tpu_custom_call.1']
    #allocation4 [shape = 's32[1]{0}', space=sflag, size = 0x4, scoped, tag = 'scoped memory for tpu_custom_call.1']
    #allocation5 [shape = 'u8[8192]{0}', space=vmem, size = 0x2000, scoped, tag = 'input window, operand 1, single buffered']
    #allocation6 [shape = 's32[1]{0}', space=sflag, size = 0x4, scoped, tag = 'scoped memory for tpu_custom_call.1']
    #allocation7 [shape = 'u8[65536]{0}', space=vmem, size = 0x10000, scoped, tag = 'input window, operand 3, single buffered']
    #allocation8 [shape = 'u8[8192]{0}', space=vmem, size = 0x2000, scoped, tag = 'output window, operand 0, single buffered']
    %10 = vsyncpa [#allocation3], 0
    %11 = vsyncpa [#allocation6], 0
    %12 = vsyncpa [#allocation4], 0
    // Predicated region
    $region2: #{tpu_custom_call.1} parent=1 // pred_check
      _
    $region3: #{tpu_custom_call.1} parent=1 // pred_check_branch
      %14 = sbr.rel (0) target = $region5
    $region4: #{tpu_custom_call.1} parent=1 // pred_region
      %s16 = ssub.s32 256, 256
      %17 = vsyncadd [#allocation3], %s16
      %s18 = sshll.u32 [#allocation2], 4
      %s19 = int_to_ptr.vmem [resolvable:$true] %s18
      %24 = dma.hbm_to_vmem [thread:$0]  %s0, 256, %s19, [#allocation3], 128, 128, 8
    $region5: #{tpu_custom_call.1} parent=1 // pred_fallthru
      _
    // Predicated region
    $region6: #{tpu_custom_call.1} parent=1 // pred_check
      _
    $region7: #{tpu_custom_call.1} parent=1 // pred_check_branch
      %26 = sbr.rel (0) target = $region9
    $region8: #{tpu_custom_call.1} parent=1 // pred_region
      %s28 = ssub.s32 256, 256
      %29 = vsyncadd [#allocation6], %s28
      %s30 = sshll.u32 [#allocation5], 4
      %s31 = int_to_ptr.vmem [resolvable:$true] %s30
      %36 = dma.hbm_to_vmem [thread:$0]  %s1, 256, %s31, [#allocation6], 128, 128, 8
    $region9: #{tpu_custom_call.1} parent=1 // pred_fallthru
      _
    // Predicated region
    $region10: #{tpu_custom_call.1} parent=1 // pred_check
      _
    $region11: #{tpu_custom_call.1} parent=1 // pred_check_branch
      %38 = sbr.rel (0) target = $region13
    $region12: #{tpu_custom_call.1} parent=1 // pred_region
      _
    $region13: #{tpu_custom_call.1} parent=1 // pred_fallthru
      _
    // Predicated region
    $region14: #{tpu_custom_call.1} parent=1 // pred_check
      _
    $region15: #{tpu_custom_call.1} parent=1 // pred_check_branch
      %40 = sbr.rel (0) target = $region17
    $region16: #{tpu_custom_call.1} parent=1 // pred_region
      %s42 = ssub.s32 2048, 2048
      %43 = vsyncadd [#allocation6], %s42
      %s44 = sshll.u32 [#allocation7], 4
      %s45 = int_to_ptr.vmem [resolvable:$true] %s44
      %50 = dma.hbm_to_vmem [thread:$0]  %s3, 2048, %s45, [#allocation6], 128, 128, 8
    $region17: #{tpu_custom_call.1} parent=1 // pred_fallthru
      _
    // Predicated region
    $region18: #{tpu_custom_call.1} parent=1 // pred_check
      _
    $region19: #{tpu_custom_call.1} parent=1 // pred_check_branch
      %52 = sbr.rel (0) target = $region21
    $region20: #{tpu_custom_call.1} parent=1 // pred_region
      _
    $region21: #{tpu_custom_call.1} parent=1 // pred_fallthru
      _
    // Predicated region
    $region22: #{tpu_custom_call.1} parent=1 // pred_check
      _
    $region23: #{tpu_custom_call.1} parent=1 // pred_check_branch
      %54 = sbr.rel (0) target = $region25
    $region24: #{tpu_custom_call.1} parent=1 // pred_region
      %55 = dma.done [#allocation3], 256
    $region25: #{tpu_custom_call.1} parent=1 // pred_fallthru
      _
    // Predicated region
    $region26: #{tpu_custom_call.1} parent=1 // pred_check
      _
    $region27: #{tpu_custom_call.1} parent=1 // pred_check_branch
      %57 = sbr.rel (0) target = $region29
    $region28: #{tpu_custom_call.1} parent=1 // pred_region
      %58 = dma.done [#allocation6], 256
    $region29: #{tpu_custom_call.1} parent=1 // pred_fallthru
      _
    // Predicated region
    $region30: #{tpu_custom_call.1} parent=1 // pred_check
      _
    $region31: #{tpu_custom_call.1} parent=1 // pred_check_branch
      %60 = sbr.rel (0) target = $region33
    $region32: #{tpu_custom_call.1} parent=1 // pred_region
      %61 = dma.done [#allocation6], 2048
    $region33: #{tpu_custom_call.1} parent=1 // pred_fallthru
      _
    %v62 = vld [vmem:[#allocation2] sm:$0xff]
    %v63 = vld [vmem:[#allocation2 + $0x8] sm:$0xff]
    %v64 = vld [vmem:[#allocation5] sm:$0xff]
    %v65 = vld [vmem:[#allocation5 + $0x8] sm:$0xff]
    %v66 = vld [vmem:[%s2] sm:$0x1]
    %v68 = vlaneseq
    %v69 = vshrl.u32 %v68, 7
    %v70 = vsub.s32 0, %v69
    %v71 = vrot.slane %v66, %v70
    %vm73 = vcmask 130048
    %v75 = vsel %vm73, %v62, 0
    %v78 = vsel %vm73, %v63, 0
    %80 = vmatprep.subr.mxu0 0.0
    %81 = vmatpush1.msra.mxu0 0.0
    %82 = vmatprep.subr.mxu0 0.0
    %83 = vmatpush1.msra.mxu0 0.0
    %84 = vmatprep.subr.mxu0 0.0
    %85 = vmatpush1.msra.mxu0 0.0
    %86 = vmatprep.subr.mxu0 0.0
    %87 = vmatpush1.msra.mxu0 0.0
    %88 = vmatprep.subr.mxu0 0.0
    %89 = vmatpush1.msra.mxu0 0.0
    %90 = vmatprep.subr.mxu0 0.0
    %91 = vmatpush1.msra.mxu0 0.0
    %92 = vmatprep.subr.mxu0 0.0
    %93 = vmatpush1.msra.mxu0 0.0
    %94 = vmatprep.subr.mxu0 0.0
    %95 = vmatpush1.msra.mxu0 0.0
    %96 = vmatprep.subr.mxu0 0.0
    %97 = vmatpush1.msra.mxu0 0.0
    %98 = vmatprep.subr.mxu0 0.0
    %99 = vmatpush1.msra.mxu0 0.0
    %100 = vmatprep.subr.mxu0 0.0
    %101 = vmatpush1.msra.mxu0 0.0
    %102 = vmatprep.subr.mxu0 0.0
    %103 = vmatpush1.msra.mxu0 0.0
    %104 = vmatprep.subr.mxu0 0.0
    %105 = vmatpush1.msra.mxu0 0.0
    %106 = vmatprep.subr.mxu0 0.0
    %107 = vmatpush1.msra.mxu0 0.0
    %108 = vmatprep.subr.mxu0 0.0
    %109 = vmatpush1.msra.mxu0 %v65
    %110 = vmatprep.subr.mxu0 0.0
    %111 = vmatpush1.msra.mxu0 %v64
    %112 = vmatprep.subr.mxu0 0.0
    %113 = vmatpush2.msra.mxu0 0.0
    %114 = vmatprep.subr.mxu0 0.0
    %115 = vmatpush2.msra.mxu0 0.0
    %116 = vmatprep.subr.mxu0 0.0
    %117 = vmatpush2.msra.mxu0 0.0
    %118 = vmatprep.subr.mxu0 0.0
    %119 = vmatpush2.msra.mxu0 0.0
    %120 = vmatprep.subr.mxu0 0.0
    %121 = vmatpush2.msra.mxu0 0.0
    %122 = vmatprep.subr.mxu0 0.0
    %123 = vmatpush2.msra.mxu0 0.0
    %124 = vmatprep.subr.mxu0 0.0
    %125 = vmatpush2.msra.mxu0 0.0
    %126 = vmatprep.subr.mxu0 0.0
    %127 = vmatpush2.msra.mxu0 0.0
    %128 = vmatprep.subr.mxu0 0.0
    %129 = vmatpush2.msra.mxu0 0.0
    %130 = vmatprep.subr.mxu0 0.0
    %131 = vmatpush2.msra.mxu0 0.0
    %132 = vmatprep.subr.mxu0 0.0
    %133 = vmatpush2.msra.mxu0 0.0
    %134 = vmatprep.subr.mxu0 0.0
    %135 = vmatpush2.msra.mxu0 0.0
    %136 = vmatprep.subr.mxu0 0.0
    %137 = vmatpush2.msra.mxu0 0.0
    %138 = vmatprep.subr.mxu0 0.0
    %139 = vmatpush2.msra.mxu0 0.0
    %140 = vmatprep.subr.mxu0 0.0
    %141 = vmatpush2.msra.mxu0 0.0
    %142 = vmatprep.subr.mxu0 0.0
    %143 = vmatpush2.msra.mxu0 0.0
    %144 = vmatprep.mubr.f32.mxu0 0.0
    %145 = vmatmul.mubr.f32.gmra.mxu0 %v75
    %v146 = vpop.f32.mrf.mxu0
    %v147 = vadd.f32 %v71, %v146
    %v148 = vpop.f32.mrf.mxu0
    %149 = vmatprep.mubr.f32.mxu0 0.0
    %150 = vmatmul.mubr.f32.gmra.mxu0 %v78
    %v151 = vpop.f32.mrf.mxu0
    %v152 = vadd.f32 %v71, %v151
    %v153 = vpop.f32.mrf.mxu0
    %154 = vdwg.mxu0
    %v155 = vmul.f32 %v147, 0.5
    %v156 = vmul.f32 %v152, 0.5
    %v157 = vmul.f32 %v147, 0.70710677
    %v158 = vmul.f32 %v152, 0.70710677
    %v159 = verf.f32.pop %v157
    %v160 = verf.f32.pop %v158
    %v161 = vadd.f32 %v159, 1.0
    %v162 = vadd.f32 %v160, 1.0
    %v163 = vmul.f32 %v155, %v161
    %v164 = vmul.f32 %v156, %v162
    %v165 = vld [vmem:[#allocation7] sm:$0xff]
    %v166 = vld [vmem:[#allocation7 + $0x8] sm:$0xff]
    %v167 = vld [vmem:[#allocation7 + $0x10] sm:$0xff]
    %v168 = vld [vmem:[#allocation7 + $0x18] sm:$0xff]
    %v169 = vld [vmem:[#allocation7 + $0x20] sm:$0xff]
    %v170 = vld [vmem:[#allocation7 + $0x28] sm:$0xff]
    %v171 = vld [vmem:[#allocation7 + $0x30] sm:$0xff]
    %v172 = vld [vmem:[#allocation7 + $0x38] sm:$0xff]
    %v173 = vld [vmem:[#allocation7 + $0x40] sm:$0xff]
    %v174 = vld [vmem:[#allocation7 + $0x48] sm:$0xff]
    %v175 = vld [vmem:[#allocation7 + $0x50] sm:$0xff]
    %v176 = vld [vmem:[#allocation7 + $0x58] sm:$0xff]
    %v177 = vld [vmem:[#allocation7 + $0x60] sm:$0xff]
    %v178 = vld [vmem:[#allocation7 + $0x68] sm:$0xff]
    %v179 = vld [vmem:[#allocation7 + $0x70] sm:$0xff]
    %v180 = vld [vmem:[#allocation7 + $0x78] sm:$0xff]
    %v181 = vld [vmem:[%s4] sm:$0x1]
    %v183 = vlaneseq
    %v184 = vshrl.u32 %v183, 7
    %v185 = vsub.s32 0, %v184
    %v186 = vrot.slane %v181, %v185
    %188 = vmatprep.subr.mxu0 0.0
    %189 = vmatpush1.msra.mxu0 %v180
    %190 = vmatprep.subr.mxu0 0.0
    %191 = vmatpush1.msra.mxu0 %v179
    %192 = vmatprep.subr.mxu0 0.0
    %193 = vmatpush1.msra.mxu0 %v178
    %194 = vmatprep.subr.mxu0 0.0
    %195 = vmatpush1.msra.mxu0 %v177
    %196 = vmatprep.subr.mxu0 0.0
    %197 = vmatpush1.msra.mxu0 %v176
    %198 = vmatprep.subr.mxu0 0.0
    %199 = vmatpush1.msra.mxu0 %v175
    %200 = vmatprep.subr.mxu0 0.0
    %201 = vmatpush1.msra.mxu0 %v174
    %202 = vmatprep.subr.mxu0 0.0
    %203 = vmatpush1.msra.mxu0 %v173
    %204 = vmatprep.subr.mxu0 0.0
    %205 = vmatpush1.msra.mxu0 %v172
    %206 = vmatprep.subr.mxu0 0.0
    %207 = vmatpush1.msra.mxu0 %v171
    %208 = vmatprep.subr.mxu0 0.0
    %209 = vmatpush1.msra.mxu0 %v170
    %210 = vmatprep.subr.mxu0 0.0
    %211 = vmatpush1.msra.mxu0 %v169
    %212 = vmatprep.subr.mxu0 0.0
    %213 = vmatpush1.msra.mxu0 %v168
    %214 = vmatprep.subr.mxu0 0.0
    %215 = vmatpush1.msra.mxu0 %v167
    %216 = vmatprep.subr.mxu0 0.0
    %217 = vmatpush1.msra.mxu0 %v166
    %218 = vmatprep.subr.mxu0 0.0
    %219 = vmatpush1.msra.mxu0 %v165
    %220 = vmatprep.subr.mxu0 0.0
    %221 = vmatpush2.msra.mxu0 0.0
    %222 = vmatprep.subr.mxu0 0.0
    %223 = vmatpush2.msra.mxu0 0.0
    %224 = vmatprep.subr.mxu0 0.0
    %225 = vmatpush2.msra.mxu0 0.0
    %226 = vmatprep.subr.mxu0 0.0
    %227 = vmatpush2.msra.mxu0 0.0
    %228 = vmatprep.subr.mxu0 0.0
    %229 = vmatpush2.msra.mxu0 0.0
    %230 = vmatprep.subr.mxu0 0.0
    %231 = vmatpush2.msra.mxu0 0.0
    %232 = vmatprep.subr.mxu0 0.0
    %233 = vmatpush2.msra.mxu0 0.0
    %234 = vmatprep.subr.mxu0 0.0
    %235 = vmatpush2.msra.mxu0 0.0
    %236 = vmatprep.subr.mxu0 0.0
    %237 = vmatpush2.msra.mxu0 0.0
    %238 = vmatprep.subr.mxu0 0.0
    %239 = vmatpush2.msra.mxu0 0.0
    %240 = vmatprep.subr.mxu0 0.0
    %241 = vmatpush2.msra.mxu0 0.0
    %242 = vmatprep.subr.mxu0 0.0
    %243 = vmatpush2.msra.mxu0 0.0
    %244 = vmatprep.subr.mxu0 0.0
    %245 = vmatpush2.msra.mxu0 0.0
    %246 = vmatprep.subr.mxu0 0.0
    %247 = vmatpush2.msra.mxu0 0.0
    %248 = vmatprep.subr.mxu0 0.0
    %249 = vmatpush2.msra.mxu0 0.0
    %250 = vmatprep.subr.mxu0 0.0
    %251 = vmatpush2.msra.mxu0 0.0
    %252 = vmatprep.mubr.f32.mxu0 0.0
    %253 = vmatmul.mubr.f32.gmra.mxu0 %v163
    %v254 = vpop.f32.mrf.mxu0
    %v255 = vadd.f32 %v186, %v254
    %v256 = vpop.f32.mrf.mxu0
    %257 = vmatprep.mubr.f32.mxu0 0.0
    %258 = vmatmul.mubr.f32.gmra.mxu0 %v164
    %v259 = vpop.f32.mrf.mxu0
    %v260 = vadd.f32 %v186, %v259
    %v261 = vpop.f32.mrf.mxu0
    %262 = vdwg.mxu0
    %263 = vst [vmem:[#allocation8] sm:$0xff] %v255
    %264 = vst [vmem:[#allocation8 + $0x8] sm:$0xff] %v260
    // Predicated region
    $region34: #{tpu_custom_call.1} parent=1 // pred_check
      _
    $region35: #{tpu_custom_call.1} parent=1 // pred_check_branch
      %266 = sbr.rel (0) target = $region37
    $region36: #{tpu_custom_call.1} parent=1 // pred_region
      %s268 = ssub.s32 256, 256
      %269 = vsyncadd [#allocation4], %s268
      %s270 = sshll.u32 [#allocation8], 4
      %s271 = int_to_ptr.vmem [resolvable:$true] %s270
      %276 = dma.vmem_to_hbm [thread:$0]  %s271, 256, %s5, [#allocation4], 128, 128, 8
    $region37: #{tpu_custom_call.1} parent=1 // pred_fallthru
      _
    // Predicated region
    $region38: #{tpu_custom_call.1} parent=1 // pred_check
      _
    $region39: #{tpu_custom_call.1} parent=1 // pred_check_branch
      %278 = sbr.rel (0) target = $region41
    $region40: #{tpu_custom_call.1} parent=1 // pred_region
      %279 = dma.done [#allocation4], 256
    $region41: #{tpu_custom_call.1} parent=1 // pred_fallthru
      _
    %280 = vsyncpa [#allocation3], 1
    %281 = vsyncpa [#allocation6], 1
    %282 = vsyncpa [#allocation4], 1

</llo_original>
